<compile_context>
chip_gen: v6e
topology: v6e:2x2x1
jax: 0.10.0
libtpu: 0.0.40
codegen_flags: <defaults>
</compile_context>

<pallas_src>
import itertools

import numpy as np
import jax
import jax.numpy as jnp
from jax.experimental import pallas as pl
from jax.experimental.pallas import tpu as pltpu

ALPHA = 0.8
BETA = 0.2
IGNORE_LABEL = 14


def _round_up(x, m):
    return ((x + m - 1) // m) * m


def _pick_tiles(bn, hw):
    """Per-generation tile sizes, VMEM limit and resident-tgt budget."""
    kind = jax.devices()[0].device_kind.lower()
    if "v7" in kind:
        # 64 MiB physical VMEM / 2 TCs per chip: guarantee >= 2 BN tiles so
        # megacore sharding engages; big HW tiles amortize per-step overhead.
        tbn_max, thw_max, vmem, tgt_budget, min_bn_tiles = 256, 4096, 48 << 20, 8 << 20, 2
    elif "v6" in kind:
        tbn_max, thw_max, vmem, tgt_budget, min_bn_tiles = 512, 4096, 100 << 20, 16 << 20, 1
    else:
        # v5e (and fallback): HBM-bound; keep M_pad=128 and modest tiles, but
        # raise the scoped VMEM limit above the 16 MiB default.
        tbn_max, thw_max, vmem, tgt_budget, min_bn_tiles = 256, 2048, 64 << 20, 16 << 20, 1

    thw = min(thw_max, _round_up(hw, 128))
    tbn = min(tbn_max, _round_up(bn, 8))
    if min_bn_tiles > 1 and bn > 8 and pl.cdiv(bn, tbn) < min_bn_tiles:
        # v7x megacore: split the "parallel" BN axis across both TensorCores.
        tbn = max(8, _round_up(pl.cdiv(bn, min_bn_tiles), 8))
    return tbn, thw, vmem, tgt_budget


def _make_kernel(hw, thw, mask_hw, tgt_resident):
    """Build the (BN-tile, HW-tile) grid-step kernel with static config baked in."""
    n_lane_chunks = thw // 128

    def kernel(pred_ref, tgt_ref, tsq_ref, probb_ref, c_ref, num_acc, psq_acc):
        # pred_ref  : (tBN, tHW)       raw predicted mask logits (native dtype)
        # tgt_ref   : (HW_pad, M_pad)  bf16 binary target masks, MXU-native (K,N)
        #             (or (tHW, M_pad) when streamed per HW tile)
        # tsq_ref   : (1, M_pad)       f32 sum(tgt) per target (hoisted)
        # probb_ref : (tBN, M_pad)     f32 matching_prob ** beta (hoisted)
        # c_ref     : (tBN, M_pad)     f32 output cost tile
        # num_acc   : (tBN, M_pad)     f32 scratch: running sigmoid(pred) @ tgt
        # psq_acc   : (tBN, 128)       f32 scratch: per-lane partial sum(pred^2)
        k = pl.program_id(1)

        @pl.when(k == 0)
        def _init():
            num_acc[...] = jnp.zeros_like(num_acc)
            psq_acc[...] = jnp.zeros_like(psq_acc)

        x = pred_ref[...].astype(jnp.float32)
        # sigmoid(x) == 0.5 * tanh(0.5 * x) + 0.5  -> single EUP op per element.
        sp = 0.5 * jnp.tanh(0.5 * x) + 0.5
        if mask_hw:
            # Ragged last HW tile: zero the out-of-bounds lanes in-kernel
            # instead of padding pred in HBM.
            col = jax.lax.broadcasted_iota(jnp.int32, sp.shape, 1)
            sp = jnp.where(k * thw + col < hw, sp, 0.0)

        if tgt_resident:
            start = pl.multiple_of(k * thw, thw)
            tgt_blk = tgt_ref[pl.ds(start, thw), :]
        else:
            tgt_blk = tgt_ref[...]

        # MXU: only the operand is bf16; accumulation stays f32.
        num_acc[...] += jax.lax.dot_general(
            sp.astype(jnp.bfloat16), tgt_blk,
            (((1,), (0,)), ((), ())),
            preferred_element_type=jnp.float32)

        # Per-lane partial sums of sigmoid(pred)^2; the cross-lane XLU reduce
        # is deferred to finalize (once per BN tile, not once per HW tile).
        sp2 = sp * sp
        part = sp2[:, 0:128]
        for j in range(1, n_lane_chunks):
            part = part + sp2[:, j * 128:(j + 1) * 128]
        psq_acc[...] += part

        @pl.when(k == pl.num_programs(1) - 1)
        def _finalize():
            psq = jnp.sum(psq_acc[...], axis=-1, keepdims=True)
            den = psq + tsq_ref[...] + 1e-4
            score = (2.0 * num_acc[...]) / den
            powa = jnp.exp(ALPHA * jnp.log(jnp.maximum(score, 1e-30)))
            # Zero-overlap (padded) target columns get exactly 0, as in torch.
            c_ref[...] = jnp.where(score > 0.0, powa, 0.0) * probb_ref[...]

    return kernel


def inst_matcher_cost(pred_masks, pred_logits, tgt_masks, tgt_ids):
    """Pallas hot path: returns the (B, N, M) matching cost matrix."""
    B, N, HW = pred_masks.shape
    M = tgt_masks.shape[0]
    BN = B * N

    tBN, tHW, vmem_limit, tgt_budget = _pick_tiles(BN, HW)
    grid_i = pl.cdiv(BN, tBN)
    grid_k = pl.cdiv(HW, tHW)
    HW_pad = grid_k * tHW
    M_pad = _round_up(M, 128)          # lane-dense output / MXU N dimension
    BN_out = grid_i * tBN

    # pred: fed straight through (no wrapper cast/pad passes over the dominant
    # operand); ragged HW is masked in-kernel, ragged BN rows are sliced off.
    pred_flat = pred_masks.reshape(BN, HW)

    # tgt (small operand): bf16 (binary -> exact), transposed once to the
    # MXU-native (K, N) layout and zero-padded on HW / M in the wrapper.
    tgt_t = jnp.pad(jnp.transpose(tgt_masks.astype(jnp.bfloat16)),
                    ((0, HW_pad - HW), (0, M_pad - M)))
    tgt_bytes = tgt_t.size * 2
    # Keep tgt fully resident in VMEM (fetched once) when the double-buffered
    # footprint fits; otherwise stream per HW tile.
    tgt_resident = 2 * tgt_bytes <= tgt_budget

    # sum(tgt^2) == sum(tgt) for binary masks; constant across BN/HW tiles.
    tsq = jnp.pad(jnp.sum(tgt_masks.astype(jnp.float32), axis=-1),
                  (0, M_pad - M)).reshape(1, M_pad)

    # matching_prob ** beta hoisted out of the kernel (XLA), gather included.
    prob = jax.nn.sigmoid(pred_logits.astype(jnp.float32)).reshape(BN, -1)[:, tgt_ids]
    prob_beta = jnp.pad(prob ** BETA, ((0, 0), (0, M_pad - M)))

    if tgt_resident:
        tgt_spec = pl.BlockSpec((HW_pad, M_pad), lambda i, k: (0, 0))
    else:
        tgt_spec = pl.BlockSpec((tHW, M_pad), lambda i, k: (k, 0))

    cost = pl.CostEstimate(
        flops=2 * BN * HW * M_pad + 6 * BN * HW,
        transcendentals=BN * HW + 2 * BN_out * M_pad,
        bytes_accessed=(int(pred_flat.size) * pred_flat.dtype.itemsize
                        + int(tgt_bytes) * (1 if tgt_resident else grid_i)
                        + int(prob_beta.size) * 4 + int(tsq.size) * 4
                        + BN_out * M_pad * 4),
    )

    kernel = _make_kernel(HW, tHW, HW % tHW != 0, tgt_resident)

    c = pl.pallas_call(
        kernel,
        out_shape=jax.ShapeDtypeStruct((BN_out, M_pad), jnp.float32),
        grid_spec=pltpu.PrefetchScalarGridSpec(
            num_scalar_prefetch=0,
            grid=(grid_i, grid_k),
            in_specs=[
                pl.BlockSpec((tBN, tHW), lambda i, k: (i, k)),    # pred
                tgt_spec,                                         # tgt (HW, M) bf16
                pl.BlockSpec((1, M_pad), lambda i, k: (0, 0)),    # sum(tgt)
                pl.BlockSpec((tBN, M_pad), lambda i, k: (i, 0)),  # prob**beta
            ],
            out_specs=pl.BlockSpec((tBN, M_pad), lambda i, k: (i, 0)),
            scratch_shapes=[
                pltpu.VMEM((tBN, M_pad), jnp.float32),   # numerator accumulator
                pltpu.VMEM((tBN, 128), jnp.float32),     # per-lane sum(pred^2)
            ]),
        compiler_params=pltpu.CompilerParams(
            dimension_semantics=("parallel", "arbitrary"),
            vmem_limit_bytes=vmem_limit),
        cost_estimate=cost,
    )(pred_flat, tgt_t, tsq, prob_beta)

    return c[:BN, :M].reshape(B, N, M)


# ----------------------------------------------------------------------------
# Host-side glue (mirrors the torch.no_grad() python loop in the reference).
# ----------------------------------------------------------------------------
def build_targets(B, H, W):
    """Deterministic integer label maps, flattened to (B, H*W)."""
    t = np.full((B, H, W), IGNORE_LABEL, dtype=np.int32)
    t[0, : H // 2, : W // 2] = 0
    t[0, : H // 2, W // 2:] = 1
    t[0, H // 2:, : W // 2] = 2
    t[1, : H // 2, :] = 3
    t[1, H // 2:, : W // 2] = 4
    return t.reshape(B, H * W)


def extract_instances(targets_np):
    """Per-batch unique labels (skipping 14) -> ids, binary masks, sizes."""
    # TODO(synk): torch.unique-style dynamic instance extraction has no clean
    # Pallas equivalent (data-dependent output count); kept as host numpy.
    tgt_ids, tgt_masks, sizes = [], [], []
    for b in range(targets_np.shape[0]):
        tgt = targets_np[b]
        cnt = 0
        for lbl in sorted(np.unique(tgt).tolist()):
            if lbl == IGNORE_LABEL:
                continue
            tgt_ids.append(lbl)
            tgt_masks.append((tgt == lbl).astype(np.float32))
            cnt += 1
        sizes.append(cnt)
    return np.asarray(tgt_ids, np.int32), np.stack(tgt_masks, 0), sizes


def linear_sum_assignment_max(cost):
    """Exact brute-force Hungarian (maximize) for small N x M, M <= N."""
    # TODO(synk): scipy.optimize.linear_sum_assignment has no Pallas equivalent;
    # brute force keeps this script dependency-free.
    N, M = cost.shape
    best, best_perm = -np.inf, None
    for perm in itertools.permutations(range(N), M):
        s = cost[list(perm), list(range(M))].sum()
        if s > best:
            best, best_perm = s, perm
    rows = np.asarray(best_perm)
    cols = np.arange(M)
    order = np.argsort(rows)
    return rows[order], cols[order]


def inst_matcher_forward(pred_masks, pred_logits, targets_np):
    """Full InstMatcher.forward: returns (indices, tgt_masks)."""
    tgt_ids_np, tgt_masks_np, sizes = extract_instances(targets_np)
    tgt_ids = jnp.asarray(tgt_ids_np)
    tgt_masks = jnp.asarray(tgt_masks_np)

    C = inst_matcher_cost(pred_masks, pred_logits, tgt_masks, tgt_ids)
    C_np = np.asarray(jax.block_until_ready(C))

    indices, off = [], 0
    for i, sz in enumerate(sizes):
        c_i = C_np[i, :, off: off + sz]
        r, c = linear_sum_assignment_max(c_i)
        indices.append((jnp.asarray(r, jnp.int32), jnp.asarray(c, jnp.int32)))
        off += sz
    return indices, tgt_masks


def _reference_cost(pred_masks, pred_logits, tgt_masks_np, tgt_ids_np):
    """Pure numpy reference of the hot path (f32), for a sanity check."""
    B, N, HW = pred_masks.shape
    p = np.asarray(pred_masks, np.float32).reshape(B * N, HW)
    t = tgt_masks_np.astype(np.float32)
    sp = 1.0 / (1.0 + np.exp(-p))
    num = 2.0 * sp @ t.T
    den = (sp * sp).sum(-1)[:, None] + (t * t).sum(-1)[None, :]
    score = num / (den + 1e-4)
    logits = np.asarray(pred_logits, np.float32).reshape(B * N, -1)
    prob = (1.0 / (1.0 + np.exp(-logits)))[:, tgt_ids_np]
    return (score ** ALPHA * prob ** BETA).reshape(B, N, -1)


if __name__ == "__main__":
    B, N, H, W, NUM_CLASSES = 2, 8, 16, 16, 15
    key = jax.random.PRNGKey(0)
    k1, k2 = jax.random.split(key)
    pred_masks = jax.random.normal(k1, (B, N, H * W), dtype=jnp.float32)
    pred_logits = jax.random.normal(k2, (B, N, NUM_CLASSES), dtype=jnp.float32)
    targets_np = build_targets(B, H, W)

    indices, tgt_masks = inst_matcher_forward(pred_masks, pred_logits, targets_np)
    jax.block_until_ready(tgt_masks)

    # Sanity check of the Pallas cost matrix vs. a pure f32 reference.
    # Tolerance accounts for the bf16 MXU feed of sigmoid(pred).
    tgt_ids_np, tgt_masks_np, _ = extract_instances(targets_np)
    C_pallas = np.asarray(
        jax.block_until_ready(
            inst_matcher_cost(pred_masks, pred_logits,
                              jnp.asarray(tgt_masks_np), jnp.asarray(tgt_ids_np))))
    C_ref = _reference_cost(pred_masks, pred_logits, tgt_masks_np, tgt_ids_np)
    assert np.allclose(C_pallas, C_ref, rtol=2e-2, atol=1e-4), "cost mismatch"

    print("KERNEL_OK")
</pallas_src>

<mosaic_0001>
module attributes {stable_mosaic.version = 11 : i64} {
  func.func @kernel(%arg0: i32, %arg1: i32, %arg2: memref<16x256xf32, #tpu.memory_space<vmem>>, %arg3: memref<256x128xbf16, #tpu.memory_space<vmem>>, %arg4: memref<1x128xf32, #tpu.memory_space<vmem>>, %arg5: memref<16x128xf32, #tpu.memory_space<vmem>>, %arg6: memref<16x128xf32, #tpu.memory_space<vmem>>, %arg7: memref<16x128xf32, #tpu.memory_space<vmem>>, %arg8: memref<16x128xf32, #tpu.memory_space<vmem>>) attributes {dimension_semantics = [#tpu.dimension_semantics<parallel>, #tpu.dimension_semantics<arbitrary>], iteration_bounds = array<i64: 1, 1>, scalar_prefetch = 0 : i64, scratch_operands = 2 : i64, tpu.core_type = #tpu.core_type<tc>, window_params = [{transform_indices = @transform_0, window_bounds = array<i64: 16, 256>}, {pipeline_mode = #tpu.pipeline_mode<synchronous>, transform_indices = @transform_1, window_bounds = array<i64: 256, 128>}, {pipeline_mode = #tpu.pipeline_mode<synchronous>, transform_indices = @transform_2, window_bounds = array<i64: 1, 128>}, {transform_indices = @transform_3, window_bounds = array<i64: 16, 128>}, {transform_indices = @transform_4, window_bounds = array<i64: 16, 128>}]} {
    %c0_i32 = arith.constant 0 : i32
    %0 = arith.cmpi eq, %arg1, %c0_i32 : i32
    %1 = arith.extui %0 : i1 to i32
    %c0_i32_0 = arith.constant 0 : i32
    %2 = arith.cmpi ne, %1, %c0_i32_0 : i32
    scf.if %2 {
      %cst_16 = arith.constant 0.000000e+00 : f32
      %30 = vector.broadcast %cst_16 : f32 to vector<16x128xf32>
      %c0_17 = arith.constant 0 : index
      %c0_18 = arith.constant 0 : index
      %31 = vector.load %arg7[%c0_17, %c0_18] : memref<16x128xf32, #tpu.memory_space<vmem>>, vector<16x128xf32>
      tpu.vector_store %arg7[%c0_17, %c0_18], %30 {strides = array<i32>} : memref<16x128xf32, #tpu.memory_space<vmem>>, vector<16x128xf32>,
      %cst_19 = arith.constant 0.000000e+00 : f32
      %32 = vector.broadcast %cst_19 : f32 to vector<16x128xf32>
      %c0_20 = arith.constant 0 : index
      %c0_21 = arith.constant 0 : index
      %33 = vector.load %arg8[%c0_20, %c0_21] : memref<16x128xf32, #tpu.memory_space<vmem>>, vector<16x128xf32>
      tpu.vector_store %arg8[%c0_20, %c0_21], %32 {strides = array<i32>} : memref<16x128xf32, #tpu.memory_space<vmem>>, vector<16x128xf32>,
    } else {
    }
    %c0 = arith.constant 0 : index
    %c0_1 = arith.constant 0 : index
    %3 = vector.load %arg2[%c0, %c0_1] : memref<16x256xf32, #tpu.memory_space<vmem>>, vector<16x256xf32>
    %cst = arith.constant 5.000000e-01 : f32
    %4 = vector.broadcast %cst : f32 to vector<16x256xf32>
    %5 = arith.mulf %4, %3 : vector<16x256xf32>
    %6 = math.tanh %5 : vector<16x256xf32>
    %cst_2 = arith.constant 5.000000e-01 : f32
    %7 = vector.broadcast %cst_2 : f32 to vector<16x256xf32>
    %8 = arith.mulf %7, %6 : vector<16x256xf32>
    %cst_3 = arith.constant 5.000000e-01 : f32
    %9 = vector.broadcast %cst_3 : f32 to vector<16x256xf32>
    %10 = arith.addf %8, %9 : vector<16x256xf32>
    %c256_i32 = arith.constant 256 : i32
    %11 = arith.muli %arg1, %c256_i32 : i32
    %12 = tpu.assume_multiple %11, 256 : i32
    %13 = arith.index_cast %12 : i32 to index
    %c0_4 = arith.constant 0 : index
    %14 = vector.load %arg3[%13, %c0_4] : memref<256x128xbf16, #tpu.memory_space<vmem>>, vector<256x128xbf16>
    %c0_5 = arith.constant 0 : index
    %c0_6 = arith.constant 0 : index
    %15 = vector.load %arg7[%c0_5, %c0_6] : memref<16x128xf32, #tpu.memory_space<vmem>>, vector<16x128xf32>
    %16 = arith.truncf %10 : vector<16x256xf32> to vector<16x256xbf16>
    %cst_7 = arith.constant dense<0.000000e+00> : vector<16x128xf32>
    %17 = tpu.matmul %16, %14, %cst_7 {dimension_numbers = #tpu.dot_dimension_numbers<[1], [0], [0], [1], [0, 0, 1, 1], [], []>} : vector<16x256xbf16>, vector<256x128xbf16>, vector<16x128xf32> -> vector<16x128xf32>
    %18 = arith.addf %15, %17 : vector<16x128xf32>
    %c0_8 = arith.constant 0 : index
    %c0_9 = arith.constant 0 : index
    %19 = vector.load %arg7[%c0_8, %c0_9] : memref<16x128xf32, #tpu.memory_space<vmem>>, vector<16x128xf32>
    tpu.vector_store %arg7[%c0_8, %c0_9], %18 {strides = array<i32>} : memref<16x128xf32, #tpu.memory_space<vmem>>, vector<16x128xf32>,
    %20 = arith.mulf %10, %10 : vector<16x256xf32>
    %21 = vector.extract_strided_slice %20 {offsets = [0, 0], sizes = [16, 128], strides = [1, 1]} : vector<16x256xf32> to vector<16x128xf32>
    %22 = vector.extract_strided_slice %20 {offsets = [0, 128], sizes = [16, 128], strides = [1, 1]} : vector<16x256xf32> to vector<16x128xf32>
    %23 = arith.addf %21, %22 : vector<16x128xf32>
    %c0_10 = arith.constant 0 : index
    %c0_11 = arith.constant 0 : index
    %24 = vector.load %arg8[%c0_10, %c0_11] : memref<16x128xf32, #tpu.memory_space<vmem>>, vector<16x128xf32>
    %25 = arith.addf %24, %23 : vector<16x128xf32>
    %c0_12 = arith.constant 0 : index
    %c0_13 = arith.constant 0 : index
    %26 = vector.load %arg8[%c0_12, %c0_13] : memref<16x128xf32, #tpu.memory_space<vmem>>, vector<16x128xf32>
    tpu.vector_store %arg8[%c0_12, %c0_13], %25 {strides = array<i32>} : memref<16x128xf32, #tpu.memory_space<vmem>>, vector<16x128xf32>,
    %c0_i32_14 = arith.constant 0 : i32
    %27 = arith.cmpi eq, %arg1, %c0_i32_14 : i32
    %28 = arith.extui %27 : i1 to i32
    %c0_i32_15 = arith.constant 0 : i32
    %29 = arith.cmpi ne, %28, %c0_i32_15 : i32
    scf.if %29 {
      %c0_16 = arith.constant 0 : index
      %c0_17 = arith.constant 0 : index
      %30 = vector.load %arg8[%c0_16, %c0_17] : memref<16x128xf32, #tpu.memory_space<vmem>>, vector<16x128xf32>
      %cst_18 = arith.constant dense<0.000000e+00> : vector<16xf32>
      %31 = vector.multi_reduction <add>, %30, %cst_18 [1] : vector<16x128xf32> to vector<16xf32>
      %32 = vector.shape_cast %31 : vector<16xf32> to vector<16x1xf32>
      %c0_19 = arith.constant 0 : index
      %c0_20 = arith.constant 0 : index
      %33 = vector.load %arg4[%c0_19, %c0_20] : memref<1x128xf32, #tpu.memory_space<vmem>>, vector<1x128xf32>
      %34 = vector.broadcast %32 : vector<16x1xf32> to vector<16x128xf32>
      %35 = vector.broadcast %33 : vector<1x128xf32> to vector<16x128xf32>
      %36 = arith.addf %34, %35 : vector<16x128xf32>
      %cst_21 = arith.constant 9.99999974E-5 : f32
      %37 = vector.broadcast %cst_21 : f32 to vector<16x128xf32>
      %38 = arith.addf %36, %37 : vector<16x128xf32>
      %c0_22 = arith.constant 0 : index
      %c0_23 = arith.constant 0 : index
      %39 = vector.load %arg7[%c0_22, %c0_23] : memref<16x128xf32, #tpu.memory_space<vmem>>, vector<16x128xf32>
      %cst_24 = arith.constant 2.000000e+00 : f32
      %40 = vector.broadcast %cst_24 : f32 to vector<16x128xf32>
      %41 = arith.mulf %40, %39 : vector<16x128xf32>
      %42 = arith.divf %41, %38 : vector<16x128xf32>
      %cst_25 = arith.constant 1.000000e-30 : f32
      %43 = vector.broadcast %cst_25 : f32 to vector<16x128xf32>
      %44 = arith.maximumf %42, %43 : vector<16x128xf32>
      %45 = math.log %44 : vector<16x128xf32>
      %cst_26 = arith.constant 8.000000e-01 : f32
      %46 = vector.broadcast %cst_26 : f32 to vector<16x128xf32>
      %47 = arith.mulf %46, %45 : vector<16x128xf32>
      %48 = math.exp %47 : vector<16x128xf32>
      %cst_27 = arith.constant 0.000000e+00 : f32
      %49 = vector.broadcast %cst_27 : f32 to vector<16x128xf32>
      %50 = arith.cmpf ogt, %42, %49 : vector<16x128xf32>
      %cst_28 = arith.constant 0.000000e+00 : f32
      %51 = vector.broadcast %cst_28 : f32 to vector<16x128xf32>
      %52 = arith.select %50, %48, %51 : vector<16x128xi1>, vector<16x128xf32>
      %c0_29 = arith.constant 0 : index
      %c0_30 = arith.constant 0 : index
      %53 = vector.load %arg5[%c0_29, %c0_30] : memref<16x128xf32, #tpu.memory_space<vmem>>, vector<16x128xf32>
      %54 = arith.mulf %52, %53 : vector<16x128xf32>
      %c0_31 = arith.constant 0 : index
      %c0_32 = arith.constant 0 : index
      %55 = vector.load %arg6[%c0_31, %c0_32] : memref<16x128xf32, #tpu.memory_space<vmem>>, vector<16x128xf32>
      tpu.vector_store %arg6[%c0_31, %c0_32], %54 {strides = array<i32>} : memref<16x128xf32, #tpu.memory_space<vmem>>, vector<16x128xf32>,
    } else {
    }
    return
  }
  func.func @transform_0(%arg0: i32, %arg1: i32) -> (i32, i32) {
    %c0_i32 = arith.constant 0 : i32
    return %arg0, %arg1 : i32, i32
  }
  func.func @transform_1(%arg0: i32, %arg1: i32) -> (i32, i32) {
    %c0_i32 = arith.constant 0 : i32
    %c0_i32_0 = arith.constant 0 : i32
    %c0_i32_1 = arith.constant 0 : i32
    return %c0_i32, %c0_i32_0 : i32, i32
  }
  func.func @transform_2(%arg0: i32, %arg1: i32) -> (i32, i32) {
    %c0_i32 = arith.constant 0 : i32
    %c0_i32_0 = arith.constant 0 : i32
    %c0_i32_1 = arith.constant 0 : i32
    return %c0_i32, %c0_i32_0 : i32, i32
  }
  func.func @transform_3(%arg0: i32, %arg1: i32) -> (i32, i32) {
    %c0_i32 = arith.constant 0 : i32
    %c0_i32_0 = arith.constant 0 : i32
    return %arg0, %c0_i32 : i32, i32
  }
  func.func @transform_4(%arg0: i32, %arg1: i32) -> (i32, i32) {
    %c0_i32 = arith.constant 0 : i32
    %c0_i32_0 = arith.constant 0 : i32
    return %arg0, %c0_i32 : i32, i32
  }
}

</mosaic_0001>

<llo_original>
// kernel: tpu_custom_call.1
$region0: #{tpu_custom_call.1}
  #allocation0 [shape = 'u32[]', space=smem, size = 0x4, offset = 0x4, fixed_abs, tag = 'smem constant byte address 0x4 - core index']
  #allocation1 [shape = 'u32[144,128]{1,0:T(1,128)}', space=vmem, size = 0x12000, scoped, tag = 'internal scratch']
  #allocation2 [shape = 'f32[16,128]{1,0:T(8,128)}', space=vmem, size = 0x2000, scoped, tag = 'scratch operand']
  #allocation3 [shape = 'f32[16,128]{1,0:T(8,128)}', space=vmem, size = 0x2000, scoped, tag = 'scratch operand']
  %s0 = inlined_call_operand.hbm [shape: f32[16,256], index: 0, kind: input, shape index: {}]
  %s1 = inlined_call_operand.hbm [shape: bf16[256,128], index: 1, kind: input, shape index: {}]
  %s2 = inlined_call_operand.vmem [shape: f32[1,128], index: 2, kind: input, shape index: {}]
  %s3 = inlined_call_operand.hbm [shape: f32[16,128], index: 3, kind: input, shape index: {}]
  %s4 = inlined_call_operand.hbm [shape: f32[16,128], index: 4, kind: output, shape index: {}]
  %s5 = sld [smem:[#allocation0]]
  $region46: #{tpu_custom_call.1} parent=0
    _
  %s7 = ssub.s32 1, %s5
  %s8 = scalar_select 0, %s7, %s5
  $region1: #{tpu_custom_call.1} parent=0
    #allocation4 [shape = 'u8[16384]{0}', space=vmem, size = 0x4000, scoped, tag = 'input window, operand 0, single buffered']
    #allocation5 [shape = 's32[1]{0}', space=sflag, size = 0x4, scoped, tag = 'scoped memory for tpu_custom_call.1']
    #allocation6 [shape = 's32[1]{0}', space=sflag, size = 0x4, scoped, tag = 'scoped memory for tpu_custom_call.1']
    #allocation7 [shape = 'u8[65536]{0}', space=vmem, size = 0x10000, scoped, tag = 'input window, operand 1, single buffered']
    #allocation8 [shape = 's32[1]{0}', space=sflag, size = 0x4, scoped, tag = 'scoped memory for tpu_custom_call.1']
    #allocation9 [shape = 'u8[8192]{0}', space=vmem, size = 0x2000, scoped, tag = 'input window, operand 3, single buffered']
    #allocation10 [shape = 'u8[8192]{0}', space=vmem, size = 0x2000, scoped, tag = 'output window, operand 0, single buffered']
    %9 = vsyncpa [#allocation5], 0
    %10 = vsyncpa [#allocation8], 0
    %11 = vsyncpa [#allocation6], 0
    // Predicated region
    $region2: #{tpu_custom_call.1} parent=1 // pred_check
      _
    $region3: #{tpu_custom_call.1} parent=1 // pred_check_branch
      %13 = sbr.rel (0) target = $region5
    $region4: #{tpu_custom_call.1} parent=1 // pred_region
      %s15 = ssub.s32 512, 512
      %16 = vsyncadd [#allocation5], %s15
      %s17 = sshll.u32 [#allocation4], 4
      %s18 = int_to_ptr.vmem [resolvable:$true] %s17
      %23 = dma.hbm_to_vmem [thread:$0]  %s0, 512, %s18, [#allocation5], 256, 256, 16
    $region5: #{tpu_custom_call.1} parent=1 // pred_fallthru
      _
    // Predicated region
    $region6: #{tpu_custom_call.1} parent=1 // pred_check
      _
    $region7: #{tpu_custom_call.1} parent=1 // pred_check_branch
      %25 = sbr.rel (0) target = $region9
    $region8: #{tpu_custom_call.1} parent=1 // pred_region
      %s27 = ssub.s32 2048, 2048
      %28 = vsyncadd [#allocation8], %s27
      %s29 = sshll.u32 [#allocation7], 4
      %s30 = int_to_ptr.vmem [resolvable:$true] %s29
      %35 = dma.hbm_to_vmem [thread:$0]  %s1, 2048, %s30, [#allocation8], 64, 64, 4
    $region9: #{tpu_custom_call.1} parent=1 // pred_fallthru
      _
    // Predicated region
    $region10: #{tpu_custom_call.1} parent=1 // pred_check
      _
    $region11: #{tpu_custom_call.1} parent=1 // pred_check_branch
      %37 = sbr.rel (0) target = $region13
    $region12: #{tpu_custom_call.1} parent=1 // pred_region
      _
    $region13: #{tpu_custom_call.1} parent=1 // pred_fallthru
      _
    // Predicated region
    $region14: #{tpu_custom_call.1} parent=1 // pred_check
      _
    $region15: #{tpu_custom_call.1} parent=1 // pred_check_branch
      %39 = sbr.rel (0) target = $region17
    $region16: #{tpu_custom_call.1} parent=1 // pred_region
      %s41 = ssub.s32 256, 256
      %42 = vsyncadd [#allocation8], %s41
      %s43 = sshll.u32 [#allocation9], 4
      %s44 = int_to_ptr.vmem [resolvable:$true] %s43
      %49 = dma.hbm_to_vmem [thread:$0]  %s3, 256, %s44, [#allocation8], 128, 128, 8
    $region17: #{tpu_custom_call.1} parent=1 // pred_fallthru
      _
    // Predicated region
    $region18: #{tpu_custom_call.1} parent=1 // pred_check
      _
    $region19: #{tpu_custom_call.1} parent=1 // pred_check_branch
      %51 = sbr.rel (0) target = $region21
    $region20: #{tpu_custom_call.1} parent=1 // pred_region
      %52 = dma.done [#allocation5], 512
    $region21: #{tpu_custom_call.1} parent=1 // pred_fallthru
      _
    // Predicated region
    $region22: #{tpu_custom_call.1} parent=1 // pred_check
      _
    $region23: #{tpu_custom_call.1} parent=1 // pred_check_branch
      %54 = sbr.rel (0) target = $region25
    $region24: #{tpu_custom_call.1} parent=1 // pred_region
      %55 = dma.done [#allocation8], 2048
    $region25: #{tpu_custom_call.1} parent=1 // pred_fallthru
      _
    // Predicated region
    $region26: #{tpu_custom_call.1} parent=1 // pred_check
      _
    $region27: #{tpu_custom_call.1} parent=1 // pred_check_branch
      %57 = sbr.rel (0) target = $region29
    $region28: #{tpu_custom_call.1} parent=1 // pred_region
      %58 = dma.done [#allocation8], 256
    $region29: #{tpu_custom_call.1} parent=1 // pred_fallthru
      _
    %p60 = scmp.eq.s32.totalorder 0, 0
    // Predicated region
    $region30: #{tpu_custom_call.1} parent=1 // pred_check
      %p61 = pneg %p60
    $region31: #{tpu_custom_call.1} parent=1 // pred_check_branch
      %63 = sbr.rel (%p61) target = $region33
    $region32: #{tpu_custom_call.1} parent=1 // pred_region
      %64 = vst [vmem:[#allocation2] sm:$0xff] 0.0
      %65 = vst [vmem:[#allocation2 + $0x8] sm:$0xff] 0.0
      %66 = vst [vmem:[#allocation3] sm:$0xff] 0.0
      %67 = vst [vmem:[#allocation3 + $0x8] sm:$0xff] 0.0
    $region33: #{tpu_custom_call.1} parent=1 // pred_fallthru
      _
    %v68 = vld [vmem:[#allocation4] sm:$0xff]
    %v69 = vld [vmem:[#allocation4 + $0x8] sm:$0xff]
    %v70 = vld [vmem:[#allocation4 + $0x10] sm:$0xff]
    %v71 = vld [vmem:[#allocation4 + $0x18] sm:$0xff]
    %v72 = vmul.f32 %v68, 0.5
    %v73 = vmul.f32 %v69, 0.5
    %v74 = vmul.f32 %v70, 0.5
    %v75 = vmul.f32 %v71, 0.5
    %v76 = vtanh.pop %v72
    %v77 = vtanh.pop %v73
    %v78 = vtanh.pop %v74
    %v79 = vtanh.pop %v75
    %v80 = vmul.f32 %v76, 0.5
    %v81 = vmul.f32 %v77, 0.5
    %v82 = vmul.f32 %v78, 0.5
    %v83 = vmul.f32 %v79, 0.5
    %v84 = vadd.f32 %v80, 0.5
    %v85 = vadd.f32 %v81, 0.5
    %v86 = vadd.f32 %v82, 0.5
    %v87 = vadd.f32 %v83, 0.5
    %s88 = smul.u32 0, 256
    %s89 = sshra.s32 %s88, 3
    %s90 = sand.u32 %s88, 7
    %s91 = smul.addr %s89, 4
    %s92 = scalar_lea.vmem [#allocation7], %s91
    %v93 = vld [vmem:[%s92] sm:$0xf]
    %v94 = vld [vmem:[%s92 + $0x4] sm:$0xf]
    %v95 = vld [vmem:[%s92 + $0x8] sm:$0xf]
    %v96 = vld [vmem:[%s92 + $0xc] sm:$0xf]
    %v97 = vld [vmem:[%s92 + $0x10] sm:$0xf]
    %v98 = vld [vmem:[%s92 + $0x14] sm:$0xf]
    %v99 = vld [vmem:[%s92 + $0x18] sm:$0xf]
    %v100 = vld [vmem:[%s92 + $0x1c] sm:$0xf]
    %v101 = vld [vmem:[%s92 + $0x20] sm:$0xf]
    %v102 = vld [vmem:[%s92 + $0x24] sm:$0xf]
    %v103 = vld [vmem:[%s92 + $0x28] sm:$0xf]
    %v104 = vld [vmem:[%s92 + $0x2c] sm:$0xf]
    %v105 = vld [vmem:[%s92 + $0x30] sm:$0xf]
    %v106 = vld [vmem:[%s92 + $0x34] sm:$0xf]
    %v107 = vld [vmem:[%s92 + $0x38] sm:$0xf]
    %v108 = vld [vmem:[%s92 + $0x3c] sm:$0xf]
    %v109 = vld [vmem:[%s92 + $0x40] sm:$0xf]
    %v110 = vld [vmem:[%s92 + $0x44] sm:$0xf]
    %v111 = vld [vmem:[%s92 + $0x48] sm:$0xf]
    %v112 = vld [vmem:[%s92 + $0x4c] sm:$0xf]
    %v113 = vld [vmem:[%s92 + $0x50] sm:$0xf]
    %v114 = vld [vmem:[%s92 + $0x54] sm:$0xf]
    %v115 = vld [vmem:[%s92 + $0x58] sm:$0xf]
    %v116 = vld [vmem:[%s92 + $0x5c] sm:$0xf]
    %v117 = vld [vmem:[%s92 + $0x60] sm:$0xf]
    %v118 = vld [vmem:[%s92 + $0x64] sm:$0xf]
    %v119 = vld [vmem:[%s92 + $0x68] sm:$0xf]
    %v120 = vld [vmem:[%s92 + $0x6c] sm:$0xf]
    %v121 = vld [vmem:[%s92 + $0x70] sm:$0xf]
    %v122 = vld [vmem:[%s92 + $0x74] sm:$0xf]
    %v123 = vld [vmem:[%s92 + $0x78] sm:$0xf]
    %v124 = vld [vmem:[%s92 + $0x7c] sm:$0xf]
    %v125 = vld [vmem:[#allocation2] sm:$0xff]
    %v126 = vld [vmem:[#allocation2 + $0x8] sm:$0xff]
    %v127 = vpack.c.bf16 %v86, %v84
    %v128 = vpack.c.bf16 %v87, %v85
    %v161 = vunpack.c.l.b16 %v93
    %v162 = vunpack.c.l.b16 %v94
    %v163 = vunpack.c.l.b16 %v95
    %v164 = vunpack.c.l.b16 %v96
    %v165 = vunpack.c.l.b16 %v97
    %v166 = vunpack.c.l.b16 %v98
    %v167 = vunpack.c.l.b16 %v99
    %v168 = vunpack.c.l.b16 %v100
    %v169 = vunpack.c.l.b16 %v101
    %v170 = vunpack.c.l.b16 %v102
    %v171 = vunpack.c.l.b16 %v103
    %v172 = vunpack.c.l.b16 %v104
    %v173 = vunpack.c.l.b16 %v105
    %v174 = vunpack.c.l.b16 %v106
    %v175 = vunpack.c.l.b16 %v107
    %v176 = vunpack.c.l.b16 %v108
    %v177 = vunpack.c.l.b16 %v109
    %v178 = vunpack.c.l.b16 %v110
    %v179 = vunpack.c.l.b16 %v111
    %v180 = vunpack.c.l.b16 %v112
    %v181 = vunpack.c.l.b16 %v113
    %v182 = vunpack.c.l.b16 %v114
    %v183 = vunpack.c.l.b16 %v115
    %v184 = vunpack.c.l.b16 %v116
    %v185 = vunpack.c.l.b16 %v117
    %v186 = vunpack.c.l.b16 %v118
    %v187 = vunpack.c.l.b16 %v119
    %v188 = vunpack.c.l.b16 %v120
    %v189 = vunpack.c.l.b16 %v121
    %v190 = vunpack.c.l.b16 %v122
    %v191 = vunpack.c.l.b16 %v123
    %v192 = vunpack.c.l.b16 %v124
    %v193 = vpack.c.b16 %v162, %v161
    %v194 = vpack.c.b16 %v164, %v163
    %v195 = vpack.c.b16 %v166, %v165
    %v196 = vpack.c.b16 %v168, %v167
    %v197 = vpack.c.b16 %v170, %v169
    %v198 = vpack.c.b16 %v172, %v171
    %v199 = vpack.c.b16 %v174, %v173
    %v200 = vpack.c.b16 %v176, %v175
    %v201 = vpack.c.b16 %v178, %v177
    %v202 = vpack.c.b16 %v180, %v179
    %v203 = vpack.c.b16 %v182, %v181
    %v204 = vpack.c.b16 %v184, %v183
    %v205 = vpack.c.b16 %v186, %v185
    %v206 = vpack.c.b16 %v188, %v187
    %v207 = vpack.c.b16 %v190, %v189
    %v208 = vpack.c.b16 %v192, %v191
    %225 = vmatprep.subr.bf16.mxu0 0
    %226 = vmatpush1.bf16.msra.mxu0 %v200
    %227 = vmatprep.subr.bf16.mxu0 0
    %228 = vmatpush1.bf16.msra.mxu0 %v199
    %229 = vmatprep.subr.bf16.mxu0 0
    %230 = vmatpush1.bf16.msra.mxu0 %v198
    %231 = vmatprep.subr.bf16.mxu0 0
    %232 = vmatpush1.bf16.msra.mxu0 %v197
    %233 = vmatprep.subr.bf16.mxu0 0
    %234 = vmatpush1.bf16.msra.mxu0 %v196
    %235 = vmatprep.subr.bf16.mxu0 0
    %236 = vmatpush1.bf16.msra.mxu0 %v195
    %237 = vmatprep.subr.bf16.mxu0 0
    %238 = vmatpush1.bf16.msra.mxu0 %v194
    %239 = vmatprep.subr.bf16.mxu0 0
    %240 = vmatpush1.bf16.msra.mxu0 %v193
    %241 = vmatprep.subr.bf16.mxu0 0
    %242 = vmatpush2.bf16.msra.mxu0 %v208
    %243 = vmatprep.subr.bf16.mxu0 0
    %244 = vmatpush2.bf16.msra.mxu0 %v207
    %245 = vmatprep.subr.bf16.mxu0 0
    %246 = vmatpush2.bf16.msra.mxu0 %v206
    %247 = vmatprep.subr.bf16.mxu0 0
    %248 = vmatpush2.bf16.msra.mxu0 %v205
    %249 = vmatprep.subr.bf16.mxu0 0
    %250 = vmatpush2.bf16.msra.mxu0 %v204
    %251 = vmatprep.subr.bf16.mxu0 0
    %252 = vmatpush2.bf16.msra.mxu0 %v203
    %253 = vmatprep.subr.bf16.mxu0 0
    %254 = vmatpush2.bf16.msra.mxu0 %v202
    %255 = vmatprep.subr.bf16.mxu0 0
    %256 = vmatpush2.bf16.msra.mxu0 %v201
    %257 = vmatprep.mubr.bf16.mxu0 %v128
    %258 = vmatmul.mubr.bf16.gmra.mxu0 %v127
    %v259 = vpop.f32.mrf.mxu0
    %v260 = vadd.f32 0.0, %v259
    %v261 = vpop.f32.mrf.mxu0
    %v262 = vpop.f32.mrf.mxu0
    %v263 = vadd.f32 0.0, %v262
    %v264 = vpop.f32.mrf.mxu0
    %265 = vdwg.mxu0
    %v266 = vadd.f32 %v125, %v260
    %v267 = vadd.f32 %v126, %v263
    %268 = vst [vmem:[#allocation2] sm:$0xff] %v266
    %269 = vst [vmem:[#allocation2 + $0x8] sm:$0xff] %v267
    %v270 = vmul.f32 %v84, %v84
    %v271 = vmul.f32 %v85, %v85
    %v272 = vmul.f32 %v86, %v86
    %v273 = vmul.f32 %v87, %v87
    %v274 = vadd.f32 %v270, %v271
    %v275 = vadd.f32 %v272, %v273
    %v276 = vld [vmem:[#allocation3] sm:$0xff]
    %v277 = vld [vmem:[#allocation3 + $0x8] sm:$0xff]
    %v278 = vadd.f32 %v276, %v274
    %v279 = vadd.f32 %v277, %v275
    %280 = vst [vmem:[#allocation3] sm:$0xff] %v278
    %281 = vst [vmem:[#allocation3 + $0x8] sm:$0xff] %v279
    // Predicated region
    $region34: #{tpu_custom_call.1} parent=1 // pred_check
      %p282 = pneg %p60
    $region35: #{tpu_custom_call.1} parent=1 // pred_check_branch
      %284 = sbr.rel (%p282) target = $region37
    $region36: #{tpu_custom_call.1} parent=1 // pred_region
      %v285 = vld [vmem:[#allocation3] sm:$0xff]
      %v286 = vld [vmem:[#allocation3 + $0x8] sm:$0xff]
      %287 = vadd.xlane.f32.xlu0 %v285
      %v288 = vpop.xlane.xlu0 %287
      %289 = vadd.xlane.f32.xlu0 %v286
      %v290 = vpop.xlane.xlu0 %289
      %v291 = vld [vmem:[%s2] sm:$0x1]
      %v293 = vlaneseq
      %v294 = vshrl.u32 %v293, 7
      %v295 = vsub.s32 0, %v294
      %v296 = vrot.slane %v291, %v295
      %v298 = vadd.f32 %v288, %v296
      %v299 = vadd.f32 %v290, %v296
      %v300 = vadd.f32 %v298, 0.0001
      %v301 = vadd.f32 %v299, 0.0001
      %v302 = vld [vmem:[#allocation2] sm:$0xff]
      %v303 = vld [vmem:[#allocation2 + $0x8] sm:$0xff]
      %v304 = vmul.f32 %v302, 2.0
      %v305 = vmul.f32 %v303, 2.0
      %v306 = vrcp.pop %v300
      %v307 = vmul.f32 %v304, %v306
      %v308 = vrcp.pop %v301
      %v309 = vmul.f32 %v305, %v308
      %v310 = vmax.f32 %v307, 1e-30
      %v311 = vmax.f32 %v309, 1e-30
      %v312 = vlog2.pop %v310
      %v313 = vmul.f32 %v312, 0.6931472
      %v314 = vlog2.pop %v311
      %v315 = vmul.f32 %v314, 0.6931472
      %v316 = vmul.f32 %v313, 0.8
      %v317 = vmul.f32 %v315, 0.8
      %v318 = vmul.f32 %v316, 1.442695
      %v319 = vpow.pop %v318
      %v320 = vmul.f32 %v317, 1.442695
      %v321 = vpow.pop %v320
      %vm322 = vcmp.gt.f32.partialorder %v307, 0.0
      %vm323 = vcmp.gt.f32.partialorder %v309, 0.0
      %v324 = vsel %vm322, %v319, 0.0
      %v325 = vsel %vm323, %v321, 0.0
      %v326 = vld [vmem:[#allocation9] sm:$0xff]
      %v327 = vld [vmem:[#allocation9 + $0x8] sm:$0xff]
      %v328 = vmul.f32 %v324, %v326
      %v329 = vmul.f32 %v325, %v327
      %330 = vst [vmem:[#allocation10] sm:$0xff] %v328
      %331 = vst [vmem:[#allocation10 + $0x8] sm:$0xff] %v329
    $region37: #{tpu_custom_call.1} parent=1 // pred_fallthru
      _
    // Predicated region
    $region38: #{tpu_custom_call.1} parent=1 // pred_check
      _
    $region39: #{tpu_custom_call.1} parent=1 // pred_check_branch
      %333 = sbr.rel (0) target = $region41
    $region40: #{tpu_custom_call.1} parent=1 // pred_region
      %s335 = ssub.s32 256, 256
      %336 = vsyncadd [#allocation6], %s335
      %s337 = sshll.u32 [#allocation10], 4
      %s338 = int_to_ptr.vmem [resolvable:$true] %s337
      %343 = dma.vmem_to_hbm [thread:$0]  %s338, 256, %s4, [#allocation6], 128, 128, 8
    $region41: #{tpu_custom_call.1} parent=1 // pred_fallthru
      _
    // Predicated region
    $region42: #{tpu_custom_call.1} parent=1 // pred_check
      _
    $region43: #{tpu_custom_call.1} parent=1 // pred_check_branch
      %345 = sbr.rel (0) target = $region45
    $region44: #{tpu_custom_call.1} parent=1 // pred_region
      %346 = dma.done [#allocation6], 256
    $region45: #{tpu_custom_call.1} parent=1 // pred_fallthru
      _
    %347 = vsyncpa [#allocation5], 1
    %348 = vsyncpa [#allocation8], 1
    %349 = vsyncpa [#allocation6], 1

</llo_original>
